<compile_context>
chip_gen: v5e
topology: v5e:2x2
jax: 0.10.0
libtpu: 0.0.40
codegen_flags: <defaults>
</compile_context>

<pallas_src>
import jax
import jax.numpy as jnp
from jax.experimental import pallas as pl
from jax.experimental.pallas import tpu as pltpu

_LANE = 128


# ---------------------------------------------------------------------------
# Kernels
# ---------------------------------------------------------------------------
def _ae_full_kernel(x_ref, w1_ref, b1_ref, w23_ref, b23_ref, w4_ref, b4_ref,
                    o_ref):
    """Fused encoder+decoder forward for one batch tile (latent collapsed)."""
    x = x_ref[...]
    h = jnp.dot(x, w1_ref[...], preferred_element_type=jnp.float32) + b1_ref[...]
    h = jnp.maximum(h, 0.0).astype(w23_ref.dtype)
    h2 = jnp.dot(h, w23_ref[...], preferred_element_type=jnp.float32) + b23_ref[...]
    h2 = jnp.maximum(h2, 0.0).astype(w4_ref.dtype)
    y = jnp.dot(h2, w4_ref[...], preferred_element_type=jnp.float32) + b4_ref[...]
    o_ref[...] = y.astype(o_ref.dtype)


def _ae_encoder_kernel(x_ref, w1_ref, b1_ref, w2_ref, b2_ref, o_ref):
    """Encoder-only forward (return_latent=True path)."""
    x = x_ref[...]
    h = jnp.dot(x, w1_ref[...], preferred_element_type=jnp.float32) + b1_ref[...]
    h = jnp.maximum(h, 0.0).astype(w2_ref.dtype)
    z = jnp.dot(h, w2_ref[...], preferred_element_type=jnp.float32) + b2_ref[...]
    o_ref[...] = z.astype(o_ref.dtype)


# ---------------------------------------------------------------------------
# Wrapper helpers
# ---------------------------------------------------------------------------
def _round_up(n, m):
    return (n + m - 1) // m * m


def _pad_cols(a, n):
    pad = n - a.shape[-1]
    if pad == 0:
        return a
    return jnp.pad(a, ((0, 0), (0, pad)))


def _full_weight_spec(shape):
    # Small weights: whole tensor resident, same block index every grid step.
    n = len(shape)
    return pl.BlockSpec(shape, lambda i, _n=n: (0,) * _n)


def _estimate_vmem_bytes(tb, in_f, n_out, hid, compute_dtype, out_dtype,
                         weight_args):
    cbytes = jnp.dtype(compute_dtype).itemsize
    obytes = jnp.dtype(out_dtype).itemsize
    io = 2 * tb * in_f * cbytes + 2 * tb * n_out * obytes   # double-buffered I/O
    w = sum(int(a.size) * a.dtype.itemsize for a in weight_args)
    inter = 3 * tb * max(hid, n_out) * 4                    # f32 intermediates
    return io + 2 * w + inter


# ---------------------------------------------------------------------------
# Public wrapper
# ---------------------------------------------------------------------------
def autoencoder_forward(x, params, *, return_latent=False, batch_tile=512,
                        compute_dtype=jnp.bfloat16, out_dtype=None):
    """Fused autoencoder forward via a single Pallas kernel.

    x:      (B, in_features)
    params: dict with w1 (in,hid), b1 (1,hid), w2 (hid,lat), b2 (1,lat),
                      w3 (lat,hid), b3 (1,hid), w4 (hid,out), b4 (1,out)
    """
    B, in_f = x.shape
    hid = params["w1"].shape[1]
    lat = params["w2"].shape[1]
    out_f = params["w4"].shape[1]
    out_dtype = x.dtype if out_dtype is None else out_dtype

    # --- batch tiling: multiple of 8 sublanes, pad batch to a tile multiple ---
    tb = min(int(batch_tile), _round_up(B, 8))
    tb = max(_round_up(tb, 8), 8)
    b_pad = _round_up(B, tb)
    if b_pad != B:
        x = jnp.pad(x, ((0, b_pad - B), (0, 0)))
    grid = (b_pad // tb,)

    w1 = params["w1"].astype(compute_dtype)
    b1 = params["b1"].astype(jnp.float32)

    if return_latent:
        n_out = _round_up(lat, _LANE)                       # lane-dense output
        w_last = _pad_cols(params["w2"], n_out).astype(compute_dtype)
        b_last = _pad_cols(params["b2"].astype(jnp.float32), n_out)
        kernel = _ae_encoder_kernel
        weight_args = (w1, b1, w_last, b_last)
        valid = lat
    else:
        # Collapse the latent bottleneck: relu((h@w2+b2)@w3+b3) ==
        # relu(h@(w2@w3) + (b2@w3+b3)).  One MXU pass instead of two tiny ones.
        w2f = params["w2"].astype(jnp.float32)
        w3f = params["w3"].astype(jnp.float32)
        w23 = (w2f @ w3f).astype(compute_dtype)
        b23 = params["b2"].astype(jnp.float32) @ w3f + params["b3"].astype(jnp.float32)
        n_out = _round_up(out_f, _LANE)                     # lane-dense output
        w4p = _pad_cols(params["w4"], n_out).astype(compute_dtype)
        b4p = _pad_cols(params["b4"].astype(jnp.float32), n_out)
        kernel = _ae_full_kernel
        weight_args = (w1, b1, w23, b23, w4p, b4p)
        valid = out_f

    x_in = x.astype(compute_dtype)

    x_spec = pl.BlockSpec((tb, in_f), lambda i: (i, 0))
    in_specs = [x_spec] + [_full_weight_spec(w.shape) for w in weight_args]
    out_spec = pl.BlockSpec((tb, n_out), lambda i: (i, 0))

    vmem_limit = int(min(
        max(2 * _estimate_vmem_bytes(tb, in_f, n_out, hid, compute_dtype,
                                     out_dtype, weight_args), 8 * 2**20),
        32 * 2**20))

    fn = pl.pallas_call(
        kernel,
        out_shape=jax.ShapeDtypeStruct((b_pad, n_out), out_dtype),
        grid_spec=pltpu.PrefetchScalarGridSpec(
            num_scalar_prefetch=0,
            grid=grid,
            in_specs=in_specs,
            out_specs=out_spec,
        ),
        compiler_params=pltpu.CompilerParams(
            dimension_semantics=("parallel",),
            vmem_limit_bytes=vmem_limit,
        ),
    )
    out = fn(x_in, *weight_args)
    return out[:B, :valid]


# ---------------------------------------------------------------------------
# Params + pure-JAX reference
# ---------------------------------------------------------------------------
def init_params(key, in_features, latent_dim, out_features, hidden_dim=128):
    """Mimics nn.Linear's uniform(-1/sqrt(fan_in), 1/sqrt(fan_in)) init."""
    def linear(k, fan_in, fan_out):
        kw, kb = jax.random.split(k)
        bound = 1.0 / jnp.sqrt(fan_in)
        w = jax.random.uniform(kw, (fan_in, fan_out), jnp.float32, -bound, bound)
        b = jax.random.uniform(kb, (1, fan_out), jnp.float32, -bound, bound)
        return w, b

    k1, k2, k3, k4 = jax.random.split(key, 4)
    w1, b1 = linear(k1, in_features, hidden_dim)
    w2, b2 = linear(k2, hidden_dim, latent_dim)
    w3, b3 = linear(k3, latent_dim, hidden_dim)
    w4, b4 = linear(k4, hidden_dim, out_features)
    return dict(w1=w1, b1=b1, w2=w2, b2=b2, w3=w3, b3=b3, w4=w4, b4=b4)


def autoencoder_ref(x, p, return_latent=False):
    h = jnp.maximum(x @ p["w1"] + p["b1"], 0.0)
    z = h @ p["w2"] + p["b2"]
    if return_latent:
        return z
    h2 = jnp.maximum(z @ p["w3"] + p["b3"], 0.0)
    return h2 @ p["w4"] + p["b4"]


# ---------------------------------------------------------------------------
# Self-test
# ---------------------------------------------------------------------------
if __name__ == "__main__":
    B, in_features, latent_dim, out_features, hidden_dim = 8, 32, 16, 32, 128

    key = jax.random.PRNGKey(0)
    kx, kp, kx2 = jax.random.split(key, 3)
    x = jax.random.normal(kx, (B, in_features), dtype=jnp.float32)
    params = init_params(kp, in_features, latent_dim, out_features, hidden_dim)

    recon_ref = autoencoder_ref(x, params, return_latent=False)
    latent_ref = autoencoder_ref(x, params, return_latent=True)

    # 1) f32-operand run: should match the reference tightly.
    recon_f32 = autoencoder_forward(x, params, return_latent=False,
                                    compute_dtype=jnp.float32)
    latent_f32 = autoencoder_forward(x, params, return_latent=True,
                                     compute_dtype=jnp.float32)
    jax.block_until_ready((recon_f32, latent_f32))
    assert recon_f32.shape == (B, out_features)
    assert latent_f32.shape == (B, latent_dim)
    assert jnp.allclose(recon_f32, recon_ref, atol=1e-4, rtol=1e-4)
    assert jnp.allclose(latent_f32, latent_ref, atol=1e-5, rtol=1e-5)

    # 2) bf16-operand fast path: loose tolerance vs. f32 reference.
    recon_bf16 = autoencoder_forward(x, params, return_latent=False)
    latent_bf16 = autoencoder_forward(x, params, return_latent=True)
    jax.block_until_ready((recon_bf16, latent_bf16))
    assert jnp.allclose(recon_bf16, recon_ref, atol=5e-2, rtol=5e-2)
    assert jnp.allclose(latent_bf16, latent_ref, atol=5e-2, rtol=5e-2)

    # 3) Multi-tile pipelined grid with non-multiple batch (padding + slicing).
    B2 = 264
    x2 = jax.random.normal(kx2, (B2, in_features), dtype=jnp.float32)
    recon2 = autoencoder_forward(x2, params, return_latent=False, batch_tile=128)
    recon2 = jax.block_until_ready(recon2)
    recon2_ref = autoencoder_ref(x2, params, return_latent=False)
    assert recon2.shape == (B2, out_features)
    assert jnp.allclose(recon2, recon2_ref, atol=5e-2, rtol=5e-2)

    print("KERNEL_OK")
</pallas_src>

<mosaic_0001>
module attributes {stable_mosaic.version = 11 : i64} {
  func.func @_ae_full_kernel(%arg0: i32, %arg1: memref<8x32xf32, #tpu.memory_space<vmem>>, %arg2: memref<32x128xf32, #tpu.memory_space<vmem>>, %arg3: memref<1x128xf32, #tpu.memory_space<vmem>>, %arg4: memref<128x128xf32, #tpu.memory_space<vmem>>, %arg5: memref<1x128xf32, #tpu.memory_space<vmem>>, %arg6: memref<128x128xf32, #tpu.memory_space<vmem>>, %arg7: memref<1x128xf32, #tpu.memory_space<vmem>>, %arg8: memref<8x128xf32, #tpu.memory_space<vmem>>) attributes {dimension_semantics = [#tpu.dimension_semantics<parallel>], iteration_bounds = array<i64: 1>, scalar_prefetch = 0 : i64, scratch_operands = 0 : i64, tpu.core_type = #tpu.core_type<tc>, window_params = [{transform_indices = @transform_0, window_bounds = array<i64: 8, 32>}, {pipeline_mode = #tpu.pipeline_mode<synchronous>, transform_indices = @transform_1, window_bounds = array<i64: 32, 128>}, {pipeline_mode = #tpu.pipeline_mode<synchronous>, transform_indices = @transform_2, window_bounds = array<i64: 1, 128>}, {pipeline_mode = #tpu.pipeline_mode<synchronous>, transform_indices = @transform_3, window_bounds = array<i64: 128, 128>}, {pipeline_mode = #tpu.pipeline_mode<synchronous>, transform_indices = @transform_4, window_bounds = array<i64: 1, 128>}, {pipeline_mode = #tpu.pipeline_mode<synchronous>, transform_indices = @transform_5, window_bounds = array<i64: 128, 128>}, {pipeline_mode = #tpu.pipeline_mode<synchronous>, transform_indices = @transform_6, window_bounds = array<i64: 1, 128>}, {transform_indices = @transform_7, window_bounds = array<i64: 8, 128>}]} {
    %c0 = arith.constant 0 : index
    %c0_0 = arith.constant 0 : index
    %0 = vector.load %arg1[%c0, %c0_0] : memref<8x32xf32, #tpu.memory_space<vmem>>, vector<8x32xf32>
    %c0_1 = arith.constant 0 : index
    %c0_2 = arith.constant 0 : index
    %1 = vector.load %arg2[%c0_1, %c0_2] : memref<32x128xf32, #tpu.memory_space<vmem>>, vector<32x128xf32>
    %cst = arith.constant dense<0.000000e+00> : vector<8x128xf32>
    %2 = tpu.matmul %0, %1, %cst {dimension_numbers = #tpu.dot_dimension_numbers<[1], [0], [0], [1], [0, 0, 1, 1], [], []>} : vector<8x32xf32>, vector<32x128xf32>, vector<8x128xf32> -> vector<8x128xf32>
    %c0_3 = arith.constant 0 : index
    %c0_4 = arith.constant 0 : index
    %3 = vector.load %arg3[%c0_3, %c0_4] : memref<1x128xf32, #tpu.memory_space<vmem>>, vector<1x128xf32>
    %4 = vector.broadcast %3 : vector<1x128xf32> to vector<8x128xf32>
    %5 = arith.addf %2, %4 : vector<8x128xf32>
    %cst_5 = arith.constant 0.000000e+00 : f32
    %6 = vector.broadcast %cst_5 : f32 to vector<8x128xf32>
    %7 = arith.maximumf %5, %6 : vector<8x128xf32>
    %c0_6 = arith.constant 0 : index
    %c0_7 = arith.constant 0 : index
    %8 = vector.load %arg4[%c0_6, %c0_7] : memref<128x128xf32, #tpu.memory_space<vmem>>, vector<128x128xf32>
    %cst_8 = arith.constant dense<0.000000e+00> : vector<8x128xf32>
    %9 = tpu.matmul %7, %8, %cst_8 {dimension_numbers = #tpu.dot_dimension_numbers<[1], [0], [0], [1], [0, 0, 1, 1], [], []>} : vector<8x128xf32>, vector<128x128xf32>, vector<8x128xf32> -> vector<8x128xf32>
    %c0_9 = arith.constant 0 : index
    %c0_10 = arith.constant 0 : index
    %10 = vector.load %arg5[%c0_9, %c0_10] : memref<1x128xf32, #tpu.memory_space<vmem>>, vector<1x128xf32>
    %11 = vector.broadcast %10 : vector<1x128xf32> to vector<8x128xf32>
    %12 = arith.addf %9, %11 : vector<8x128xf32>
    %cst_11 = arith.constant 0.000000e+00 : f32
    %13 = vector.broadcast %cst_11 : f32 to vector<8x128xf32>
    %14 = arith.maximumf %12, %13 : vector<8x128xf32>
    %c0_12 = arith.constant 0 : index
    %c0_13 = arith.constant 0 : index
    %15 = vector.load %arg6[%c0_12, %c0_13] : memref<128x128xf32, #tpu.memory_space<vmem>>, vector<128x128xf32>
    %cst_14 = arith.constant dense<0.000000e+00> : vector<8x128xf32>
    %16 = tpu.matmul %14, %15, %cst_14 {dimension_numbers = #tpu.dot_dimension_numbers<[1], [0], [0], [1], [0, 0, 1, 1], [], []>} : vector<8x128xf32>, vector<128x128xf32>, vector<8x128xf32> -> vector<8x128xf32>
    %c0_15 = arith.constant 0 : index
    %c0_16 = arith.constant 0 : index
    %17 = vector.load %arg7[%c0_15, %c0_16] : memref<1x128xf32, #tpu.memory_space<vmem>>, vector<1x128xf32>
    %18 = vector.broadcast %17 : vector<1x128xf32> to vector<8x128xf32>
    %19 = arith.addf %16, %18 : vector<8x128xf32>
    %c0_17 = arith.constant 0 : index
    %c0_18 = arith.constant 0 : index
    %20 = vector.load %arg8[%c0_17, %c0_18] : memref<8x128xf32, #tpu.memory_space<vmem>>, vector<8x128xf32>
    tpu.vector_store %arg8[%c0_17, %c0_18], %19 {strides = array<i32>} : memref<8x128xf32, #tpu.memory_space<vmem>>, vector<8x128xf32>,
    return
  }
  func.func @transform_0(%arg0: i32) -> (i32, i32) {
    %c0_i32 = arith.constant 0 : i32
    %c0_i32_0 = arith.constant 0 : i32
    return %arg0, %c0_i32 : i32, i32
  }
  func.func @transform_1(%arg0: i32) -> (i32, i32) {
    %c0_i32 = arith.constant 0 : i32
    %c0_i32_0 = arith.constant 0 : i32
    %c0_i32_1 = arith.constant 0 : i32
    return %c0_i32, %c0_i32_0 : i32, i32
  }
  func.func @transform_2(%arg0: i32) -> (i32, i32) {
    %c0_i32 = arith.constant 0 : i32
    %c0_i32_0 = arith.constant 0 : i32
    %c0_i32_1 = arith.constant 0 : i32
    return %c0_i32, %c0_i32_0 : i32, i32
  }
  func.func @transform_3(%arg0: i32) -> (i32, i32) {
    %c0_i32 = arith.constant 0 : i32
    %c0_i32_0 = arith.constant 0 : i32
    %c0_i32_1 = arith.constant 0 : i32
    return %c0_i32, %c0_i32_0 : i32, i32
  }
  func.func @transform_4(%arg0: i32) -> (i32, i32) {
    %c0_i32 = arith.constant 0 : i32
    %c0_i32_0 = arith.constant 0 : i32
    %c0_i32_1 = arith.constant 0 : i32
    return %c0_i32, %c0_i32_0 : i32, i32
  }
  func.func @transform_5(%arg0: i32) -> (i32, i32) {
    %c0_i32 = arith.constant 0 : i32
    %c0_i32_0 = arith.constant 0 : i32
    %c0_i32_1 = arith.constant 0 : i32
    return %c0_i32, %c0_i32_0 : i32, i32
  }
  func.func @transform_6(%arg0: i32) -> (i32, i32) {
    %c0_i32 = arith.constant 0 : i32
    %c0_i32_0 = arith.constant 0 : i32
    %c0_i32_1 = arith.constant 0 : i32
    return %c0_i32, %c0_i32_0 : i32, i32
  }
  func.func @transform_7(%arg0: i32) -> (i32, i32) {
    %c0_i32 = arith.constant 0 : i32
    %c0_i32_0 = arith.constant 0 : i32
    return %arg0, %c0_i32 : i32, i32
  }
}

</mosaic_0001>

<llo_original>
// kernel: tpu_custom_call.1
$region0: #{tpu_custom_call.1}
  #allocation0 [shape = 'u32[]', space=smem, size = 0x4, offset = 0x4, fixed_abs, tag = 'smem constant byte address 0x4 - core index']
  #allocation1 [shape = 'u32[72,128]{1,0:T(1,128)}', space=vmem, size = 0x9000, scoped, tag = 'internal scratch']
  %s0 = inlined_call_operand.hbm [shape: f32[8,32], index: 0, kind: input, shape index: {}]
  %s1 = inlined_call_operand.hbm [shape: f32[32,128], index: 1, kind: input, shape index: {}]
  %s2 = inlined_call_operand.vmem [shape: f32[1,128], index: 2, kind: input, shape index: {}]
  %s3 = inlined_call_operand.hbm [shape: f32[128,128], index: 3, kind: input, shape index: {}]
  %s4 = inlined_call_operand.vmem [shape: f32[1,128], index: 4, kind: input, shape index: {}]
  %s5 = inlined_call_operand.hbm [shape: f32[128,128], index: 5, kind: input, shape index: {}]
  %s6 = inlined_call_operand.vmem [shape: f32[1,128], index: 6, kind: input, shape index: {}]
  %s7 = inlined_call_operand.hbm [shape: f32[8,128], index: 7, kind: output, shape index: {}]
  %s8 = sld [smem:[#allocation0]]
  $region54: #{tpu_custom_call.1} parent=0
    _
  %s10 = ssub.s32 1, %s8
  %s11 = scalar_select 0, %s10, %s8
  $region1: #{tpu_custom_call.1} parent=0
    #allocation2 [shape = 'u8[4096]{0}', space=vmem, size = 0x1000, scoped, tag = 'input window, operand 0, single buffered']
    #allocation3 [shape = 's32[1]{0}', space=sflag, size = 0x4, scoped, tag = 'scoped memory for tpu_custom_call.1']
    #allocation4 [shape = 's32[1]{0}', space=sflag, size = 0x4, scoped, tag = 'scoped memory for tpu_custom_call.1']
    #allocation5 [shape = 'u8[16384]{0}', space=vmem, size = 0x4000, scoped, tag = 'input window, operand 1, single buffered']
    #allocation6 [shape = 's32[1]{0}', space=sflag, size = 0x4, scoped, tag = 'scoped memory for tpu_custom_call.1']
    #allocation7 [shape = 'u8[65536]{0}', space=vmem, size = 0x10000, scoped, tag = 'input window, operand 3, single buffered']
    #allocation8 [shape = 'u8[65536]{0}', space=vmem, size = 0x10000, scoped, tag = 'input window, operand 5, single buffered']
    #allocation9 [shape = 's32[1]{0}', space=sflag, size = 0x4, scoped, tag = 'scoped memory for tpu_custom_call.1']
    #allocation10 [shape = 'u8[4096]{0}', space=vmem, size = 0x1000, scoped, tag = 'output window, operand 0, single buffered']
    %12 = vsyncpa [#allocation3], 0
    %13 = vsyncpa [#allocation6], 0
    %14 = vsyncpa [#allocation9], 0
    %15 = vsyncpa [#allocation4], 0
    // Predicated region
    $region2: #{tpu_custom_call.1} parent=1 // pred_check
      _
    $region3: #{tpu_custom_call.1} parent=1 // pred_check_branch
      %17 = sbr.rel (0) target = $region5
    $region4: #{tpu_custom_call.1} parent=1 // pred_region
      %19 = vsyncadd [#allocation3], 0
      %s21 = sshll.u32 %s0, 4
      %s22 = int_to_ptr.hbm [resolvable:$true] %s21
      %s23 = sshll.u32 [#allocation2], 4
      %s24 = int_to_ptr.vmem [resolvable:$true] %s23
      %26 = dma.hbm_to_vmem [thread:$0]  %s22, 128, %s24, [#allocation3]
    $region5: #{tpu_custom_call.1} parent=1 // pred_fallthru
      _
    // Predicated region
    $region6: #{tpu_custom_call.1} parent=1 // pred_check
      _
    $region7: #{tpu_custom_call.1} parent=1 // pred_check_branch
      %28 = sbr.rel (0) target = $region9
    $region8: #{tpu_custom_call.1} parent=1 // pred_region
      %30 = vsyncadd [#allocation6], 0
      %s31 = sshll.u32 %s1, 4
      %s32 = int_to_ptr.hbm [resolvable:$true] %s31
      %s33 = sshll.u32 [#allocation5], 4
      %s34 = int_to_ptr.vmem [resolvable:$true] %s33
      %39 = dma.hbm_to_vmem [thread:$0]  %s32, 512, %s34, [#allocation6], 128, 128, 8
    $region9: #{tpu_custom_call.1} parent=1 // pred_fallthru
      _
    // Predicated region
    $region10: #{tpu_custom_call.1} parent=1 // pred_check
      _
    $region11: #{tpu_custom_call.1} parent=1 // pred_check_branch
      %41 = sbr.rel (0) target = $region13
    $region12: #{tpu_custom_call.1} parent=1 // pred_region
      _
    $region13: #{tpu_custom_call.1} parent=1 // pred_fallthru
      _
    // Predicated region
    $region14: #{tpu_custom_call.1} parent=1 // pred_check
      _
    $region15: #{tpu_custom_call.1} parent=1 // pred_check_branch
      %43 = sbr.rel (0) target = $region17
    $region16: #{tpu_custom_call.1} parent=1 // pred_region
      %45 = vsyncadd [#allocation6], 0
      %s46 = sshll.u32 %s3, 4
      %s47 = int_to_ptr.hbm [resolvable:$true] %s46
      %s48 = sshll.u32 [#allocation7], 4
      %s49 = int_to_ptr.vmem [resolvable:$true] %s48
      %54 = dma.hbm_to_vmem [thread:$0]  %s47, 2048, %s49, [#allocation6], 128, 128, 8
    $region17: #{tpu_custom_call.1} parent=1 // pred_fallthru
      _
    // Predicated region
    $region18: #{tpu_custom_call.1} parent=1 // pred_check
      _
    $region19: #{tpu_custom_call.1} parent=1 // pred_check_branch
      %56 = sbr.rel (0) target = $region21
    $region20: #{tpu_custom_call.1} parent=1 // pred_region
      _
    $region21: #{tpu_custom_call.1} parent=1 // pred_fallthru
      _
    // Predicated region
    $region22: #{tpu_custom_call.1} parent=1 // pred_check
      _
    $region23: #{tpu_custom_call.1} parent=1 // pred_check_branch
      %58 = sbr.rel (0) target = $region25
    $region24: #{tpu_custom_call.1} parent=1 // pred_region
      %60 = vsyncadd [#allocation9], 0
      %s61 = sshll.u32 %s5, 4
      %s62 = int_to_ptr.hbm [resolvable:$true] %s61
      %s63 = sshll.u32 [#allocation8], 4
      %s64 = int_to_ptr.vmem [resolvable:$true] %s63
      %69 = dma.hbm_to_vmem [thread:$0]  %s62, 2048, %s64, [#allocation9], 128, 128, 8
    $region25: #{tpu_custom_call.1} parent=1 // pred_fallthru
      _
    // Predicated region
    $region26: #{tpu_custom_call.1} parent=1 // pred_check
      _
    $region27: #{tpu_custom_call.1} parent=1 // pred_check_branch
      %71 = sbr.rel (0) target = $region29
    $region28: #{tpu_custom_call.1} parent=1 // pred_region
      _
    $region29: #{tpu_custom_call.1} parent=1 // pred_fallthru
      _
    // Predicated region
    $region30: #{tpu_custom_call.1} parent=1 // pred_check
      _
    $region31: #{tpu_custom_call.1} parent=1 // pred_check_branch
      %73 = sbr.rel (0) target = $region33
    $region32: #{tpu_custom_call.1} parent=1 // pred_region
      %75 = dma.done [#allocation3], 128
    $region33: #{tpu_custom_call.1} parent=1 // pred_fallthru
      _
    // Predicated region
    $region34: #{tpu_custom_call.1} parent=1 // pred_check
      _
    $region35: #{tpu_custom_call.1} parent=1 // pred_check_branch
      %77 = sbr.rel (0) target = $region37
    $region36: #{tpu_custom_call.1} parent=1 // pred_region
      %79 = dma.done [#allocation6], 512
    $region37: #{tpu_custom_call.1} parent=1 // pred_fallthru
      _
    // Predicated region
    $region38: #{tpu_custom_call.1} parent=1 // pred_check
      _
    $region39: #{tpu_custom_call.1} parent=1 // pred_check_branch
      %81 = sbr.rel (0) target = $region41
    $region40: #{tpu_custom_call.1} parent=1 // pred_region
      %83 = dma.done [#allocation6], 2048
    $region41: #{tpu_custom_call.1} parent=1 // pred_fallthru
      _
    // Predicated region
    $region42: #{tpu_custom_call.1} parent=1 // pred_check
      _
    $region43: #{tpu_custom_call.1} parent=1 // pred_check_branch
      %85 = sbr.rel (0) target = $region45
    $region44: #{tpu_custom_call.1} parent=1 // pred_region
      %87 = dma.done [#allocation9], 2048
    $region45: #{tpu_custom_call.1} parent=1 // pred_fallthru
      _
    %v88 = vld [vmem:[#allocation2] sm:$0xff]
    %v89 = vld [vmem:[#allocation5] sm:$0xff]
    %v90 = vld [vmem:[#allocation5 + $0x8] sm:$0xff]
    %v91 = vld [vmem:[#allocation5 + $0x10] sm:$0xff]
    %v92 = vld [vmem:[#allocation5 + $0x18] sm:$0xff]
    %v93 = vld [vmem:[%s2] sm:$0x1]
    %v95 = vperm.slane %v93, 0
    %vm97 = vcmask 261120
    %v99 = vsel %vm97, %v88, 0
    %101 = vmatpush.msra.mxu0 0.0
    %102 = vmatpush.msra.mxu0 0.0
    %103 = vmatpush.msra.mxu0 0.0
    %104 = vmatpush.msra.mxu0 0.0
    %105 = vmatpush.msra.mxu0 0.0
    %106 = vmatpush.msra.mxu0 0.0
    %107 = vmatpush.msra.mxu0 0.0
    %108 = vmatpush.msra.mxu0 0.0
    %109 = vmatpush.msra.mxu0 0.0
    %110 = vmatpush.msra.mxu0 0.0
    %111 = vmatpush.msra.mxu0 0.0
    %112 = vmatpush.msra.mxu0 0.0
    %113 = vmatpush.msra.mxu0 %v92
    %114 = vmatpush.msra.mxu0 %v91
    %115 = vmatpush.msra.mxu0 %v90
    %116 = vmatpush.msra.mxu0 %v89
    %117 = vmatmul.f32.gmra.mxu0 %v99
    %v118 = vpop.f32.mrf.mxu0
    %v119 = vadd.f32 %v95, %v118
    %120 = vdwg.mxu0
    %v121 = vmax.f32 %v119, 0.0
    %v122 = vld [vmem:[#allocation7] sm:$0xff]
    %v123 = vld [vmem:[#allocation7 + $0x8] sm:$0xff]
    %v124 = vld [vmem:[#allocation7 + $0x10] sm:$0xff]
    %v125 = vld [vmem:[#allocation7 + $0x18] sm:$0xff]
    %v126 = vld [vmem:[#allocation7 + $0x20] sm:$0xff]
    %v127 = vld [vmem:[#allocation7 + $0x28] sm:$0xff]
    %v128 = vld [vmem:[#allocation7 + $0x30] sm:$0xff]
    %v129 = vld [vmem:[#allocation7 + $0x38] sm:$0xff]
    %v130 = vld [vmem:[#allocation7 + $0x40] sm:$0xff]
    %v131 = vld [vmem:[#allocation7 + $0x48] sm:$0xff]
    %v132 = vld [vmem:[#allocation7 + $0x50] sm:$0xff]
    %v133 = vld [vmem:[#allocation7 + $0x58] sm:$0xff]
    %v134 = vld [vmem:[#allocation7 + $0x60] sm:$0xff]
    %v135 = vld [vmem:[#allocation7 + $0x68] sm:$0xff]
    %v136 = vld [vmem:[#allocation7 + $0x70] sm:$0xff]
    %v137 = vld [vmem:[#allocation7 + $0x78] sm:$0xff]
    %v138 = vld [vmem:[%s4] sm:$0x1]
    %v140 = vperm.slane %v138, 0
    %142 = vmatpush.msra.mxu0 %v137
    %143 = vmatpush.msra.mxu0 %v136
    %144 = vmatpush.msra.mxu0 %v135
    %145 = vmatpush.msra.mxu0 %v134
    %146 = vmatpush.msra.mxu0 %v133
    %147 = vmatpush.msra.mxu0 %v132
    %148 = vmatpush.msra.mxu0 %v131
    %149 = vmatpush.msra.mxu0 %v130
    %150 = vmatpush.msra.mxu0 %v129
    %151 = vmatpush.msra.mxu0 %v128
    %152 = vmatpush.msra.mxu0 %v127
    %153 = vmatpush.msra.mxu0 %v126
    %154 = vmatpush.msra.mxu0 %v125
    %155 = vmatpush.msra.mxu0 %v124
    %156 = vmatpush.msra.mxu0 %v123
    %157 = vmatpush.msra.mxu0 %v122
    %158 = vmatmul.f32.gmra.mxu0 %v121
    %v159 = vpop.f32.mrf.mxu0
    %v160 = vadd.f32 %v140, %v159
    %161 = vdwg.mxu0
    %v162 = vmax.f32 %v160, 0.0
    %v163 = vld [vmem:[#allocation8] sm:$0xff]
    %v164 = vld [vmem:[#allocation8 + $0x8] sm:$0xff]
    %v165 = vld [vmem:[#allocation8 + $0x10] sm:$0xff]
    %v166 = vld [vmem:[#allocation8 + $0x18] sm:$0xff]
    %v167 = vld [vmem:[#allocation8 + $0x20] sm:$0xff]
    %v168 = vld [vmem:[#allocation8 + $0x28] sm:$0xff]
    %v169 = vld [vmem:[#allocation8 + $0x30] sm:$0xff]
    %v170 = vld [vmem:[#allocation8 + $0x38] sm:$0xff]
    %v171 = vld [vmem:[#allocation8 + $0x40] sm:$0xff]
    %v172 = vld [vmem:[#allocation8 + $0x48] sm:$0xff]
    %v173 = vld [vmem:[#allocation8 + $0x50] sm:$0xff]
    %v174 = vld [vmem:[#allocation8 + $0x58] sm:$0xff]
    %v175 = vld [vmem:[#allocation8 + $0x60] sm:$0xff]
    %v176 = vld [vmem:[#allocation8 + $0x68] sm:$0xff]
    %v177 = vld [vmem:[#allocation8 + $0x70] sm:$0xff]
    %v178 = vld [vmem:[#allocation8 + $0x78] sm:$0xff]
    %v179 = vld [vmem:[%s6] sm:$0x1]
    %v181 = vperm.slane %v179, 0
    %183 = vmatpush.msra.mxu0 %v178
    %184 = vmatpush.msra.mxu0 %v177
    %185 = vmatpush.msra.mxu0 %v176
    %186 = vmatpush.msra.mxu0 %v175
    %187 = vmatpush.msra.mxu0 %v174
    %188 = vmatpush.msra.mxu0 %v173
    %189 = vmatpush.msra.mxu0 %v172
    %190 = vmatpush.msra.mxu0 %v171
    %191 = vmatpush.msra.mxu0 %v170
    %192 = vmatpush.msra.mxu0 %v169
    %193 = vmatpush.msra.mxu0 %v168
    %194 = vmatpush.msra.mxu0 %v167
    %195 = vmatpush.msra.mxu0 %v166
    %196 = vmatpush.msra.mxu0 %v165
    %197 = vmatpush.msra.mxu0 %v164
    %198 = vmatpush.msra.mxu0 %v163
    %199 = vmatmul.f32.gmra.mxu0 %v162
    %v200 = vpop.f32.mrf.mxu0
    %v201 = vadd.f32 %v181, %v200
    %202 = vdwg.mxu0
    %203 = vst [vmem:[#allocation10] sm:$0xff] %v201
    // Predicated region
    $region46: #{tpu_custom_call.1} parent=1 // pred_check
      _
    $region47: #{tpu_custom_call.1} parent=1 // pred_check_branch
      %205 = sbr.rel (0) target = $region49
    $region48: #{tpu_custom_call.1} parent=1 // pred_region
      %207 = vsyncadd [#allocation4], 0
      %s209 = sshll.u32 [#allocation10], 4
      %s210 = int_to_ptr.vmem [resolvable:$true] %s209
      %s211 = sshll.u32 %s7, 4
      %s212 = int_to_ptr.hbm [resolvable:$true] %s211
      %214 = dma.vmem_to_hbm [thread:$0]  %s210, 128, %s212, [#allocation4]
    $region49: #{tpu_custom_call.1} parent=1 // pred_fallthru
      _
    // Predicated region
    $region50: #{tpu_custom_call.1} parent=1 // pred_check
      _
    $region51: #{tpu_custom_call.1} parent=1 // pred_check_branch
      %216 = sbr.rel (0) target = $region53
    $region52: #{tpu_custom_call.1} parent=1 // pred_region
      %218 = dma.done [#allocation4], 128
    $region53: #{tpu_custom_call.1} parent=1 // pred_fallthru
      _
    %219 = vsyncpa [#allocation3], 1
    %220 = vsyncpa [#allocation6], 1
    %221 = vsyncpa [#allocation9], 1
    %222 = vsyncpa [#allocation4], 1

</llo_original>
